<compile_context>
chip_gen: v7x
topology: tpu7x:2x2x1
jax: 0.10.0
libtpu: 0.0.40
codegen_flags: <defaults>
</compile_context>

<pallas_src>
import jax
import jax.numpy as jnp
from jax.experimental import pallas as pl
from jax.experimental.pallas import tpu as pltpu


def film_kernel(x_ref, gamma_ref, beta_ref, o_ref):
    # x_ref:     (tile_r, tile_hw)  rows are flattened (batch*channel)
    # gamma_ref: (tile_r, 1)        f32, sublane-resident -> lane broadcast
    # beta_ref:  (tile_r, 1)        f32
    o_ref[...] = (x_ref[...] * gamma_ref[...] + beta_ref[...]).astype(o_ref.dtype)


def _round_down(v, m):
    return (v // m) * m


def film_forward(x, cond, wg, bg, wb, bb):
    """x: (B, C, H, W) NCHW; cond: (B, D); wg/wb: (D, C); bg/bb: (C,).

    Returns (B, C, H, W), identical semantics to the PyTorch FiLM module.
    """
    B, C, H, W = x.shape
    HW = H * W
    R = B * C
    itemsize = jnp.dtype(x.dtype).itemsize
    # Packed-sublane multiple for this dtype: f32 -> 8, bf16 -> 16, int8/fp8 -> 32.
    sub = max(8, 32 // itemsize)

    # Tiny Linear layers hoisted out of the hot path; (B*C, 1) so the in-kernel
    # broadcast is purely along lanes.  Kept in f32 (VPU has ample slack).
    gamma = (cond @ wg + bg).astype(jnp.float32).reshape(R, 1)
    beta = (cond @ wb + bb).astype(jnp.float32).reshape(R, 1)

    # NCHW -> (B*C, HW) is a free, contiguous reshape.
    x_flat = x.reshape(R, HW)

    # Lane-align the spatial axis so output stores are unmasked vst.
    # No-op when HW is already a multiple of 128 (e.g. the 16x16 test shape).
    HW_pad = ((HW + 127) // 128) * 128
    if HW_pad != HW:
        # TODO(synk): for tiny non-aligned feature maps the pad/slice passes may
        # cost more than the masked stores they avoid; revisit if profiled.
        x_flat = jnp.pad(x_flat, ((0, 0), (0, HW_pad - HW)))

    # --- Generation-aware VMEM budget -------------------------------------
    # v5e/v6e: 128 MiB physical -> 64 MiB limit; v7x: 64 MiB physical -> 48 MiB.
    try:
        phys_vmem = getattr(pltpu.get_tpu_info(), "vmem_capacity_bytes", None)
    except Exception:
        phys_vmem = None
    phys_vmem = phys_vmem or (64 * 1024 * 1024)  # conservative fallback (v7x per-TC)
    vmem_limit = min(64 * 1024 * 1024, (phys_vmem * 3) // 4)
    # x-in and x-out are each double-buffered -> ~4x block bytes resident;
    # divide by 5 for headroom (gamma/beta blocks + compiler scratch are tiny).
    tile_budget = vmem_limit // 5

    bytes_per_row = HW_pad * itemsize           # true dtype itemsize
    total_bytes = R * bytes_per_row

    # --- Pick (tile_r, tile_hw) -------------------------------------------
    rows_fit = _round_down(tile_budget // bytes_per_row, sub)
    if rows_fit >= sub:
        # Full lane extent per block; tile rows only.
        tile_hw = HW_pad
        tile_r = R if R <= rows_fit else rows_fit
    else:
        # Even `sub` rows at full lane extent blow the budget (very large H*W):
        # add a lane-tiling axis in 128-multiples.  Critical for v7x's 64 MiB.
        tile_r = sub if R > sub else R
        tile_hw = max(128, _round_down(tile_budget // (max(tile_r, 1) * itemsize), 128))
        tile_hw = min(tile_hw, HW_pad)

    # Never run a 1-step grid over a large array: keep >= 4 steps so DMAs stay
    # in flight and both v7x TensorCores get sharded work.
    n_steps = pl.cdiv(R, tile_r) * pl.cdiv(HW_pad, tile_hw)
    if total_bytes > (1 << 20) and n_steps < 4:
        if R >= 4 * sub:
            tile_r = max(sub, _round_down(R // 4, sub))
        else:
            tile_hw = max(128, _round_down(HW_pad // 4, 128))

    grid = (pl.cdiv(R, tile_r), pl.cdiv(HW_pad, tile_hw))

    out_flat = pl.pallas_call(
        film_kernel,
        out_shape=jax.ShapeDtypeStruct((R, HW_pad), x.dtype),
        grid_spec=pltpu.PrefetchScalarGridSpec(
            num_scalar_prefetch=0,
            grid=grid,
            in_specs=[
                pl.BlockSpec((tile_r, tile_hw), lambda i, j: (i, j)),  # x tile
                pl.BlockSpec((tile_r, 1), lambda i, j: (i, 0)),        # gamma
                pl.BlockSpec((tile_r, 1), lambda i, j: (i, 0)),        # beta
            ],
            out_specs=pl.BlockSpec((tile_r, tile_hw), lambda i, j: (i, j)),
        ),
        compiler_params=pltpu.CompilerParams(
            # Both axes are independent (no reduction): parallel for v7x 2-TC sharding;
            # measured no-op on single-TC v5e/v6e.
            dimension_semantics=("parallel", "parallel"),
            vmem_limit_bytes=vmem_limit,
        ),
    )(x_flat, gamma, beta)

    if HW_pad != HW:
        out_flat = out_flat[:, :HW]
    return out_flat.reshape(B, C, H, W)


if __name__ == "__main__":
    # Small shapes consistent with the module's forward.
    B, C, H, W = 2, 4, 16, 16     # num_features = C
    D = 8                         # conditioning_dim

    key = jax.random.PRNGKey(0)
    kx, kc, kwg, kbg, kwb, kbb = jax.random.split(key, 6)

    x = jax.random.normal(kx, (B, C, H, W), dtype=jnp.float32)
    cond = jax.random.normal(kc, (B, D), dtype=jnp.float32)

    # nn.Linear parameters (weight stored transposed (D, C) for cond @ W).
    bound = 1.0 / jnp.sqrt(D)
    wg = jax.random.uniform(kwg, (D, C), minval=-bound, maxval=bound, dtype=jnp.float32)
    bg = jax.random.uniform(kbg, (C,), minval=-bound, maxval=bound, dtype=jnp.float32)
    wb = jax.random.uniform(kwb, (D, C), minval=-bound, maxval=bound, dtype=jnp.float32)
    bb = jax.random.uniform(kbb, (C,), minval=-bound, maxval=bound, dtype=jnp.float32)

    out = film_forward(x, cond, wg, bg, wb, bb)
    out = jax.block_until_ready(out)

    # Pure-JAX reference (identical semantics to the PyTorch module).
    gamma_ref = (cond @ wg + bg)[:, :, None, None]
    beta_ref = (cond @ wb + bb)[:, :, None, None]
    ref = x * gamma_ref + beta_ref

    assert out.shape == (B, C, H, W)
    assert jnp.allclose(out, ref, atol=1e-5, rtol=1e-5), "mismatch vs reference"
    print("KERNEL_OK")
</pallas_src>

<mosaic_0001>
module attributes {stable_mosaic.version = 11 : i64} {
  func.func @film_kernel(%arg0: i32, %arg1: i32, %arg2: memref<8x256xf32, #tpu.memory_space<vmem>>, %arg3: memref<8x1xf32, #tpu.memory_space<vmem>>, %arg4: memref<8x1xf32, #tpu.memory_space<vmem>>, %arg5: memref<8x256xf32, #tpu.memory_space<vmem>>) attributes {dimension_semantics = [#tpu.dimension_semantics<parallel>, #tpu.dimension_semantics<parallel>], iteration_bounds = array<i64: 1, 1>, scalar_prefetch = 0 : i64, scratch_operands = 0 : i64, tpu.core_type = #tpu.core_type<tc>, window_params = [{transform_indices = @transform_0, window_bounds = array<i64: 8, 256>}, {transform_indices = @transform_1, window_bounds = array<i64: 8, 1>}, {transform_indices = @transform_2, window_bounds = array<i64: 8, 1>}, {transform_indices = @transform_3, window_bounds = array<i64: 8, 256>}]} {
    %c0 = arith.constant 0 : index
    %c0_0 = arith.constant 0 : index
    %0 = vector.load %arg2[%c0, %c0_0] : memref<8x256xf32, #tpu.memory_space<vmem>>, vector<8x256xf32>
    %c0_1 = arith.constant 0 : index
    %c0_2 = arith.constant 0 : index
    %1 = vector.load %arg3[%c0_1, %c0_2] : memref<8x1xf32, #tpu.memory_space<vmem>>, vector<8x1xf32>
    %2 = vector.broadcast %1 : vector<8x1xf32> to vector<8x256xf32>
    %3 = arith.mulf %0, %2 : vector<8x256xf32>
    %c0_3 = arith.constant 0 : index
    %c0_4 = arith.constant 0 : index
    %4 = vector.load %arg4[%c0_3, %c0_4] : memref<8x1xf32, #tpu.memory_space<vmem>>, vector<8x1xf32>
    %5 = vector.broadcast %4 : vector<8x1xf32> to vector<8x256xf32>
    %6 = arith.addf %3, %5 : vector<8x256xf32>
    %c0_5 = arith.constant 0 : index
    %c0_6 = arith.constant 0 : index
    %7 = vector.load %arg5[%c0_5, %c0_6] : memref<8x256xf32, #tpu.memory_space<vmem>>, vector<8x256xf32>
    tpu.vector_store %arg5[%c0_5, %c0_6], %6 {strides = array<i32>} : memref<8x256xf32, #tpu.memory_space<vmem>>, vector<8x256xf32>,
    return
  }
  func.func @transform_0(%arg0: i32, %arg1: i32) -> (i32, i32) {
    %c0_i32 = arith.constant 0 : i32
    return %arg0, %arg1 : i32, i32
  }
  func.func @transform_1(%arg0: i32, %arg1: i32) -> (i32, i32) {
    %c0_i32 = arith.constant 0 : i32
    %c0_i32_0 = arith.constant 0 : i32
    return %arg0, %c0_i32 : i32, i32
  }
  func.func @transform_2(%arg0: i32, %arg1: i32) -> (i32, i32) {
    %c0_i32 = arith.constant 0 : i32
    %c0_i32_0 = arith.constant 0 : i32
    return %arg0, %c0_i32 : i32, i32
  }
  func.func @transform_3(%arg0: i32, %arg1: i32) -> (i32, i32) {
    %c0_i32 = arith.constant 0 : i32
    return %arg0, %arg1 : i32, i32
  }
}

</mosaic_0001>

<llo_original>
// kernel: tpu_custom_call.1
$region0: #{tpu_custom_call.1}
  #allocation0 [shape = 'u32[]', space=smem, size = 0x4, offset = 0x4, fixed_abs, tag = 'smem constant byte address 0x4 - core index']
  #allocation1 [shape = 'u32[144,128]{1,0:T(1,128)}', space=vmem, size = 0x12000, scoped, tag = 'internal scratch']
  %s0 = inlined_call_operand.vmem [shape: f32[8,256], index: 0, kind: input, shape index: {}]
  %s1 = inlined_call_operand.vmem [shape: f32[8,1], index: 1, kind: input, shape index: {}]
  %s2 = inlined_call_operand.vmem [shape: f32[8,1], index: 2, kind: input, shape index: {}]
  %s3 = inlined_call_operand.hbm [shape: f32[8,256], index: 3, kind: output, shape index: {}]
  %s4 = sld [smem:[#allocation0]]
  $region22: #{tpu_custom_call.1} parent=0
    _
  %s6 = ssub.s32 1, %s4
  %s7 = scalar_select 0, %s6, %s4
  $region1: #{tpu_custom_call.1} parent=0
    #allocation2 [shape = 'u8[8192]{0}', space=vmem, size = 0x2000, scoped, tag = 'output window, operand 0, single buffered']
    #allocation3 [shape = 's32[1]{0}', space=sflag, size = 0x4, scoped, tag = 'scoped memory for tpu_custom_call.1']
    %8 = vsyncpa [#allocation3], 0
    // Predicated region
    $region2: #{tpu_custom_call.1} parent=1 // pred_check
      _
    $region3: #{tpu_custom_call.1} parent=1 // pred_check_branch
      %10 = sbr.rel (0) target = $region5
    $region4: #{tpu_custom_call.1} parent=1 // pred_region
      _
    $region5: #{tpu_custom_call.1} parent=1 // pred_fallthru
      _
    // Predicated region
    $region6: #{tpu_custom_call.1} parent=1 // pred_check
      _
    $region7: #{tpu_custom_call.1} parent=1 // pred_check_branch
      %12 = sbr.rel (0) target = $region9
    $region8: #{tpu_custom_call.1} parent=1 // pred_region
      _
    $region9: #{tpu_custom_call.1} parent=1 // pred_fallthru
      _
    // Predicated region
    $region10: #{tpu_custom_call.1} parent=1 // pred_check
      _
    $region11: #{tpu_custom_call.1} parent=1 // pred_check_branch
      %14 = sbr.rel (0) target = $region13
    $region12: #{tpu_custom_call.1} parent=1 // pred_region
      _
    $region13: #{tpu_custom_call.1} parent=1 // pred_fallthru
      _
    %v15 = vld [vmem:[%s0] sm:$0xff]
    %v16 = vld [vmem:[%s0 + $0x8] sm:$0xff]
    %v17 = vld [vmem:[%s1] sm:$0xff]
    %19 = vset.pattern.permute.xlu0 0
    %20 = vperm.xlu0 %19, %v17
    %v21 = vpop.permute.xlu0 %20
    %v23 = vmul.f32 %v15, %v21
    %v24 = vmul.f32 %v16, %v21
    %v25 = vld [vmem:[%s2] sm:$0xff]
    %27 = vset.pattern.permute.xlu0 0
    %28 = vperm.xlu0 %27, %v25
    %v29 = vpop.permute.xlu0 %28
    %v31 = vadd.f32 %v23, %v29
    %v32 = vadd.f32 %v24, %v29
    %33 = vst [vmem:[#allocation2] sm:$0xff] %v31
    %34 = vst [vmem:[#allocation2 + $0x8] sm:$0xff] %v32
    // Predicated region
    $region14: #{tpu_custom_call.1} parent=1 // pred_check
      _
    $region15: #{tpu_custom_call.1} parent=1 // pred_check_branch
      %36 = sbr.rel (0) target = $region17
    $region16: #{tpu_custom_call.1} parent=1 // pred_region
      %s38 = ssub.s32 256, 256
      %39 = vsyncadd [#allocation3], %s38
      %s41 = sshll.u32 [#allocation2], 4
      %s42 = int_to_ptr.vmem [resolvable:$true] %s41
      %44 = dma.vmem_to_hbm [thread:$0]  %s42, 256, %s3, [#allocation3]
    $region17: #{tpu_custom_call.1} parent=1 // pred_fallthru
      _
    // Predicated region
    $region18: #{tpu_custom_call.1} parent=1 // pred_check
      _
    $region19: #{tpu_custom_call.1} parent=1 // pred_check_branch
      %46 = sbr.rel (0) target = $region21
    $region20: #{tpu_custom_call.1} parent=1 // pred_region
      %47 = dma.done [#allocation3], 256
    $region21: #{tpu_custom_call.1} parent=1 // pred_fallthru
      _
    %48 = vsyncpa [#allocation3], 1

</llo_original>
